<compile_context>
chip_gen: v5e
topology: v5e:2x2
jax: 0.10.0
libtpu: 0.0.40
codegen_flags: <defaults>
</compile_context>

<pallas_src>
import functools

import jax
import jax.numpy as jnp
from jax.experimental import pallas as pl
from jax.experimental.pallas import tpu as pltpu

_LANE = 128  # TPU vreg lane width


def _round_up(x, m):
    return ((x + m - 1) // m) * m


def _encoder_kernel(x_ref, w_ref, b_ref, o_ref):
    # x_ref: (bn, C_in, tile_l)   w_ref: (C_out, C_in)   b_ref: (C_out, 1)
    # o_ref: (bn, C_out, tile_l)
    w = w_ref[...]
    bias = b_ref[...]
    bn = x_ref.shape[0]

    def step(i):
        y = jnp.dot(w, x_ref[i], preferred_element_type=jnp.float32)
        o_ref[i] = (y + bias).astype(o_ref.dtype)

    if bn <= 8:
        # Short static unroll: gives the scheduler full visibility.
        for i in range(bn):
            step(i)
    else:
        # Larger batch blocks: bounded loop keeps live ranges small.
        @pl.loop(0, bn)
        def _(i):
            step(i)


@functools.partial(jax.jit, static_argnames=("tile_l", "tile_n"))
def encoder_forward(x, params, *, tile_l=65536, tile_n=None):
    """Fused Encoder forward (eval mode).

    x: (N, C_in, L) float32.
    params: dict of w1 (C_mid,C_in), b1 (C_mid,1), w2 (C_out,C_mid),
            b2 (C_out,1), w3 (C_out,C_out), b3 (C_out,1).
    Returns (N, C_out, L).
    """
    N, C_in, L = x.shape
    w1, b1 = params["w1"], params["b1"]
    w2, b2 = params["w2"], params["b2"]
    w3, b3 = params["w3"], params["b3"]
    C_out = w3.shape[0]
    itemsize = x.dtype.itemsize

    # ---- Algebraic fusion (valid because dropout == identity in eval) --------
    w_eff = (w3 @ (w2 @ w1)).astype(jnp.float32)           # (C_out, C_in)
    b_eff = (w3 @ (w2 @ b1 + b2) + b3).astype(jnp.float32)  # (C_out, 1)

    # ---- Length tile ----------------------------------------------------------
    vmem_budget = 24 << 20  # budget for double-buffered (in + out) tiles
    tl = max(_LANE, (int(tile_l) // _LANE) * _LANE)
    # Cap so double-buffered in+out tiles stay within the budget (bn=1 basis).
    tl = min(tl, max(_LANE,
                     (vmem_budget // (2 * (C_in + C_out) * itemsize)) // _LANE * _LANE))
    # Keep ~>= 8 length steps when L is long enough (v7x 2-TC sharding + pipeline depth).
    tl = min(tl, _round_up(max(_LANE, -(-L // 8)), _LANE))
    if L <= tl:
        tl, gl = L, 1               # full-extent last dim: legal at any alignment
    else:
        gl = pl.cdiv(L, tl)         # ragged last tile: OOB writes are masked

    # ---- Batch block (pack several batch rows per step when L is small) ------
    if tile_n is None:
        per_row = C_in * tl * itemsize
        bn = int(min(N, max(1, (1 << 20) // max(per_row, 1)), 32))
    else:
        bn = int(min(max(int(tile_n), 1), N))
    bn = min(bn, max(1, vmem_budget // max(2 * (C_in + C_out) * tl * itemsize, 1)))
    while N % bn:                    # keep the batch grid exact
        bn -= 1
    gn = N // bn

    grid = (gn, gl)

    out = pl.pallas_call(
        _encoder_kernel,
        out_shape=jax.ShapeDtypeStruct((N, C_out, L), x.dtype),
        grid_spec=pltpu.PrefetchScalarGridSpec(
            num_scalar_prefetch=0,
            grid=grid,
            in_specs=[
                pl.BlockSpec((bn, C_in, tl), lambda n, t: (n, 0, t)),   # x tile
                pl.BlockSpec((C_out, C_in), lambda n, t: (0, 0)),       # fused W (resident)
                pl.BlockSpec((C_out, 1), lambda n, t: (0, 0)),          # fused b (resident)
            ],
            out_specs=pl.BlockSpec((bn, C_out, tl), lambda n, t: (n, 0, t)),
        ),
        compiler_params=pltpu.CompilerParams(
            dimension_semantics=("parallel", "parallel"),
            # Leave headroom below v7x's 64 MiB physical VMEM.
            vmem_limit_bytes=48 * 1024 * 1024,
        ),
    )(x, w_eff, b_eff)
    return out


def _init_params(key, in_channels=7, out_channels=7):
    """Deterministic init matching nn.Conv1d parameter shapes (kernel_size=1 squeezed)."""
    c_mid = in_channels // 2
    ks = jax.random.split(key, 6)

    def conv_init(kw, kb, c_out, c_in):
        # PyTorch Conv1d default init: U(-bound, bound), bound = 1/sqrt(c_in * k)
        bound = 1.0 / jnp.sqrt(jnp.float32(c_in * 1))
        w = jax.random.uniform(kw, (c_out, c_in), jnp.float32, -bound, bound)
        b = jax.random.uniform(kb, (c_out, 1), jnp.float32, -bound, bound)
        return w, b

    w1, b1 = conv_init(ks[0], ks[1], c_mid, in_channels)
    w2, b2 = conv_init(ks[2], ks[3], out_channels, c_mid)
    w3, b3 = conv_init(ks[4], ks[5], out_channels, out_channels)
    return {"w1": w1, "b1": b1, "w2": w2, "b2": b2, "w3": w3, "b3": b3}


def _reference(x, p):
    h1 = jnp.einsum("oi,nil->nol", p["w1"], x) + p["b1"][None]
    h2 = jnp.einsum("oi,nil->nol", p["w2"], h1) + p["b2"][None]
    h3 = jnp.einsum("oi,nil->nol", p["w3"], h2) + p["b3"][None]
    return h3


if __name__ == "__main__":
    key = jax.random.PRNGKey(0)
    k_x, k_p = jax.random.split(key)
    params = _init_params(k_p, in_channels=7, out_channels=7)

    # Shapes exercise: (a) lane-dense length tiling, (b) ragged last length tile,
    # (c) small-L / larger-N batch-blocked path.
    test_shapes = [(4, 7, 512), (6, 7, 200), (20, 7, 64)]
    for (N, C_in, L) in test_shapes:
        kx = jax.random.fold_in(k_x, N * 131 + L)
        x = jax.random.normal(kx, (N, C_in, L), jnp.float32)

        out = encoder_forward(x, params)
        out = jax.block_until_ready(out)

        ref = _reference(x, params)
        assert out.shape == ref.shape, (out.shape, ref.shape)
        assert jnp.allclose(out, ref, atol=1e-5, rtol=1e-5), f"mismatch at shape {(N, C_in, L)}"

    print("KERNEL_OK")
</pallas_src>

<mosaic_0001>
module attributes {stable_mosaic.version = 11 : i64} {
  func.func @_encoder_kernel(%arg0: i32, %arg1: i32, %arg2: memref<4x7x128xf32, #tpu.memory_space<vmem>>, %arg3: memref<7x7xf32, #tpu.memory_space<vmem>>, %arg4: memref<7x1xf32, #tpu.memory_space<vmem>>, %arg5: memref<4x7x128xf32, #tpu.memory_space<vmem>>) attributes {dimension_semantics = [#tpu.dimension_semantics<parallel>, #tpu.dimension_semantics<parallel>], iteration_bounds = array<i64: 1, 4>, scalar_prefetch = 0 : i64, scratch_operands = 0 : i64, tpu.core_type = #tpu.core_type<tc>, window_params = [{transform_indices = @transform_0, window_bounds = array<i64: 4, 7, 128>}, {pipeline_mode = #tpu.pipeline_mode<synchronous>, transform_indices = @transform_1, window_bounds = array<i64: 7, 7>}, {pipeline_mode = #tpu.pipeline_mode<synchronous>, transform_indices = @transform_2, window_bounds = array<i64: 7, 1>}, {transform_indices = @transform_3, window_bounds = array<i64: 4, 7, 128>}]} {
    %c0 = arith.constant 0 : index
    %c0_0 = arith.constant 0 : index
    %0 = vector.load %arg3[%c0, %c0_0] : memref<7x7xf32, #tpu.memory_space<vmem>>, vector<7x7xf32>
    %c0_1 = arith.constant 0 : index
    %c0_2 = arith.constant 0 : index
    %1 = vector.load %arg4[%c0_1, %c0_2] : memref<7x1xf32, #tpu.memory_space<vmem>>, vector<7x1xf32>
    %c0_3 = arith.constant 0 : index
    %c0_4 = arith.constant 0 : index
    %c0_5 = arith.constant 0 : index
    %2 = vector.load %arg2[%c0_3, %c0_4, %c0_5] : memref<4x7x128xf32, #tpu.memory_space<vmem>>, vector<1x7x128xf32>
    %3 = vector.shape_cast %2 : vector<1x7x128xf32> to vector<7x128xf32>
    %cst = arith.constant dense<0.000000e+00> : vector<7x128xf32>
    %4 = tpu.matmul %0, %3, %cst {dimension_numbers = #tpu.dot_dimension_numbers<[1], [0], [0], [1], [0, 0, 1, 1], [], []>} : vector<7x7xf32>, vector<7x128xf32>, vector<7x128xf32> -> vector<7x128xf32>
    %5 = vector.broadcast %1 : vector<7x1xf32> to vector<7x128xf32>
    %6 = arith.addf %4, %5 : vector<7x128xf32>
    %c0_6 = arith.constant 0 : index
    %c0_7 = arith.constant 0 : index
    %c0_8 = arith.constant 0 : index
    %7 = vector.load %arg5[%c0_6, %c0_7, %c0_8] : memref<4x7x128xf32, #tpu.memory_space<vmem>>, vector<1x7x128xf32>
    %8 = vector.shape_cast %7 : vector<1x7x128xf32> to vector<7x128xf32>
    %9 = vector.shape_cast %6 : vector<7x128xf32> to vector<1x7x128xf32>
    tpu.vector_store %arg5[%c0_6, %c0_7, %c0_8], %9 {strides = array<i32>} : memref<4x7x128xf32, #tpu.memory_space<vmem>>, vector<1x7x128xf32>,
    %c1 = arith.constant 1 : index
    %c0_9 = arith.constant 0 : index
    %c0_10 = arith.constant 0 : index
    %10 = vector.load %arg2[%c1, %c0_9, %c0_10] : memref<4x7x128xf32, #tpu.memory_space<vmem>>, vector<1x7x128xf32>
    %11 = vector.shape_cast %10 : vector<1x7x128xf32> to vector<7x128xf32>
    %cst_11 = arith.constant dense<0.000000e+00> : vector<7x128xf32>
    %12 = tpu.matmul %0, %11, %cst_11 {dimension_numbers = #tpu.dot_dimension_numbers<[1], [0], [0], [1], [0, 0, 1, 1], [], []>} : vector<7x7xf32>, vector<7x128xf32>, vector<7x128xf32> -> vector<7x128xf32>
    %13 = vector.broadcast %1 : vector<7x1xf32> to vector<7x128xf32>
    %14 = arith.addf %12, %13 : vector<7x128xf32>
    %c1_12 = arith.constant 1 : index
    %c0_13 = arith.constant 0 : index
    %c0_14 = arith.constant 0 : index
    %15 = vector.load %arg5[%c1_12, %c0_13, %c0_14] : memref<4x7x128xf32, #tpu.memory_space<vmem>>, vector<1x7x128xf32>
    %16 = vector.shape_cast %15 : vector<1x7x128xf32> to vector<7x128xf32>
    %17 = vector.shape_cast %14 : vector<7x128xf32> to vector<1x7x128xf32>
    tpu.vector_store %arg5[%c1_12, %c0_13, %c0_14], %17 {strides = array<i32>} : memref<4x7x128xf32, #tpu.memory_space<vmem>>, vector<1x7x128xf32>,
    %c2 = arith.constant 2 : index
    %c0_15 = arith.constant 0 : index
    %c0_16 = arith.constant 0 : index
    %18 = vector.load %arg2[%c2, %c0_15, %c0_16] : memref<4x7x128xf32, #tpu.memory_space<vmem>>, vector<1x7x128xf32>
    %19 = vector.shape_cast %18 : vector<1x7x128xf32> to vector<7x128xf32>
    %cst_17 = arith.constant dense<0.000000e+00> : vector<7x128xf32>
    %20 = tpu.matmul %0, %19, %cst_17 {dimension_numbers = #tpu.dot_dimension_numbers<[1], [0], [0], [1], [0, 0, 1, 1], [], []>} : vector<7x7xf32>, vector<7x128xf32>, vector<7x128xf32> -> vector<7x128xf32>
    %21 = vector.broadcast %1 : vector<7x1xf32> to vector<7x128xf32>
    %22 = arith.addf %20, %21 : vector<7x128xf32>
    %c2_18 = arith.constant 2 : index
    %c0_19 = arith.constant 0 : index
    %c0_20 = arith.constant 0 : index
    %23 = vector.load %arg5[%c2_18, %c0_19, %c0_20] : memref<4x7x128xf32, #tpu.memory_space<vmem>>, vector<1x7x128xf32>
    %24 = vector.shape_cast %23 : vector<1x7x128xf32> to vector<7x128xf32>
    %25 = vector.shape_cast %22 : vector<7x128xf32> to vector<1x7x128xf32>
    tpu.vector_store %arg5[%c2_18, %c0_19, %c0_20], %25 {strides = array<i32>} : memref<4x7x128xf32, #tpu.memory_space<vmem>>, vector<1x7x128xf32>,
    %c3 = arith.constant 3 : index
    %c0_21 = arith.constant 0 : index
    %c0_22 = arith.constant 0 : index
    %26 = vector.load %arg2[%c3, %c0_21, %c0_22] : memref<4x7x128xf32, #tpu.memory_space<vmem>>, vector<1x7x128xf32>
    %27 = vector.shape_cast %26 : vector<1x7x128xf32> to vector<7x128xf32>
    %cst_23 = arith.constant dense<0.000000e+00> : vector<7x128xf32>
    %28 = tpu.matmul %0, %27, %cst_23 {dimension_numbers = #tpu.dot_dimension_numbers<[1], [0], [0], [1], [0, 0, 1, 1], [], []>} : vector<7x7xf32>, vector<7x128xf32>, vector<7x128xf32> -> vector<7x128xf32>
    %29 = vector.broadcast %1 : vector<7x1xf32> to vector<7x128xf32>
    %30 = arith.addf %28, %29 : vector<7x128xf32>
    %c3_24 = arith.constant 3 : index
    %c0_25 = arith.constant 0 : index
    %c0_26 = arith.constant 0 : index
    %31 = vector.load %arg5[%c3_24, %c0_25, %c0_26] : memref<4x7x128xf32, #tpu.memory_space<vmem>>, vector<1x7x128xf32>
    %32 = vector.shape_cast %31 : vector<1x7x128xf32> to vector<7x128xf32>
    %33 = vector.shape_cast %30 : vector<7x128xf32> to vector<1x7x128xf32>
    tpu.vector_store %arg5[%c3_24, %c0_25, %c0_26], %33 {strides = array<i32>} : memref<4x7x128xf32, #tpu.memory_space<vmem>>, vector<1x7x128xf32>,
    return
  }
  func.func @transform_0(%arg0: i32, %arg1: i32) -> (i32, i32, i32) {
    %c0_i32 = arith.constant 0 : i32
    %c0_i32_0 = arith.constant 0 : i32
    return %arg0, %c0_i32, %arg1 : i32, i32, i32
  }
  func.func @transform_1(%arg0: i32, %arg1: i32) -> (i32, i32) {
    %c0_i32 = arith.constant 0 : i32
    %c0_i32_0 = arith.constant 0 : i32
    %c0_i32_1 = arith.constant 0 : i32
    return %c0_i32, %c0_i32_0 : i32, i32
  }
  func.func @transform_2(%arg0: i32, %arg1: i32) -> (i32, i32) {
    %c0_i32 = arith.constant 0 : i32
    %c0_i32_0 = arith.constant 0 : i32
    %c0_i32_1 = arith.constant 0 : i32
    return %c0_i32, %c0_i32_0 : i32, i32
  }
  func.func @transform_3(%arg0: i32, %arg1: i32) -> (i32, i32, i32) {
    %c0_i32 = arith.constant 0 : i32
    %c0_i32_0 = arith.constant 0 : i32
    return %arg0, %c0_i32, %arg1 : i32, i32, i32
  }
}

</mosaic_0001>

<llo_original>
// kernel: encoder_forward.1
$region0: #{encoder_forward.1}
  #allocation0 [shape = 'u32[]', space=smem, size = 0x4, offset = 0x4, fixed_abs, tag = 'smem constant byte address 0x4 - core index']
  #allocation1 [shape = 'u32[72,128]{1,0:T(1,128)}', space=vmem, size = 0x9000, scoped, tag = 'internal scratch']
  %s0 = inlined_call_operand.vmem [shape: f32[4,7,512], index: 0, kind: input, shape index: {}]
  %s1 = inlined_call_operand.vmem [shape: f32[7,7], index: 1, kind: input, shape index: {}]
  %s2 = inlined_call_operand.vmem [shape: f32[7,1], index: 2, kind: input, shape index: {}]
  %s3 = inlined_call_operand.vmem [shape: f32[4,7,512], index: 3, kind: output, shape index: {}]
  %s4 = sld [smem:[#allocation0]]
  $region117: #{encoder_forward.1} parent=0
    _
  %s6 = ssub.s32 1, %s4
  %s7 = scalar_select 0, %s6, %s4
  $region1: #{encoder_forward.1} parent=0
    #allocation2 [shape = 'u8[32768]{0}', space=vmem, size = 0x8000, scoped, tag = 'input window, operand 0']
    #allocation3 [shape = 'u8[32768]{0}', space=vmem, size = 0x8000, scoped, tag = 'output window, operand 0']
    loop: start=0, step=1, limit=6
    $region2: #{encoder_forward.1} parent=1 // loop_pre_header
      _
    $region3: #{encoder_forward.1} parent=1 // loop_header
      %s9 = sphi 0, %s13
      %p10 = scmp.ge.s32.totalorder %s9, 6
      %s16 = sphi 0, %s28
      %s17 = sphi 0, %s24
      %s18 = sphi 0, %s16
      %s19 = sphi 0, %s17
      %s20 = sphi 0, %s18
      %s21 = sphi 0, %s19
      %s33 = sphi 0, %s35
      %s36 = sphi 0, %s33
      %s37 = sphi 0, %s36
      %s53 = sphi 0, %s37
      %s57 = sphi 0, %s57
      %s59 = sphi 0, %s57
      %s60 = sphi 0, %s59
      %s74 = sphi 0, %s60
      %s78 = sphi 0, %s78
      %s80 = sphi 0, %s78
      %s81 = sphi 0, %s80
      %s95 = sphi 0, %s81
      %s103 = sphi 0, %s105
      %s106 = sphi 0, %s103
      %s107 = sphi 0, %s106
      %s123 = sphi 0, %s107
    $region4: #{encoder_forward.1} parent=1 // loop_header_branch
      %12 = sbr.rel (%p10) target = $region8
    $region5: #{encoder_forward.1} parent=1 // loop_body
      %s14 = ssub.s32 %s9, 1
      %s15 = ssub.s32 %s9, 2
      %s22 = sadd.s32 1, %s17
      %p23 = scmp.ge.s32.totalorder %s22, 4
      %s24 = scalar_select %p23, 0, %s22
      %s25 = sadd.s32 1, %s16
      %s26 = scalar_select %p23, %s25, %s16
      %p27 = scmp.ge.s32.totalorder %s26, 1
      %s28 = scalar_select %p27, 0, %s26
      %s29 = ssub.s32 %s16, %s28
      %s30 = ssub.s32 %s17, %s24
      %s31 = sor.u32 %s29, %s30
      %p32 = scmp.eq.s32.totalorder %s31, 0
      %s34 = sadd.s32 %s33, 1
      %s35 = scalar_select %p32, %s33, %s34
      %p38 = pneg %p32
      %p39 = scmp.eq.s32.totalorder %s9, 3
      %p40 = por %p38, %p39
      %p41 = scmp.ne.s32.totalorder %s33, %s36
      %p42 = scmp.eq.s32.totalorder %s9, 0
      %p43 = por %p41, %p42
      %p44 = scmp.ne.s32.totalorder %s33, %s36
      %p45 = scmp.eq.s32.totalorder %s14, 3
      %p46 = por %p44, %p45
      %p47 = scmp.ne.s32.totalorder %s36, %s37
      %p48 = scmp.eq.s32.totalorder %s14, 0
      %p49 = por %p47, %p48
      %p50 = scmp.ne.s32.totalorder %s36, %s37
      %p51 = scmp.eq.s32.totalorder %s15, 3
      %p52 = por %p50, %p51
      %p54 = scmp.ne.s32.totalorder %s37, %s53
      %p55 = scmp.eq.s32.totalorder %s15, 0
      %p56 = por %p54, %p55
      %s58 = sadd.s32 %s57, 1
      %p61 = scmp.eq.s32.totalorder %s9, 3
      %p62 = scmp.ne.s32.totalorder %s57, %s59
      %p63 = scmp.eq.s32.totalorder %s9, 0
      %p64 = por %p62, %p63
      %p65 = scmp.ne.s32.totalorder %s57, %s59
      %p66 = scmp.eq.s32.totalorder %s14, 3
      %p67 = por %p65, %p66
      %p68 = scmp.ne.s32.totalorder %s59, %s60
      %p69 = scmp.eq.s32.totalorder %s14, 0
      %p70 = por %p68, %p69
      %p71 = scmp.ne.s32.totalorder %s59, %s60
      %p72 = scmp.eq.s32.totalorder %s15, 3
      %p73 = por %p71, %p72
      %p75 = scmp.ne.s32.totalorder %s60, %s74
      %p76 = scmp.eq.s32.totalorder %s15, 0
      %p77 = por %p75, %p76
      %s79 = sadd.s32 %s78, 1
      %p82 = scmp.eq.s32.totalorder %s9, 3
      %p83 = scmp.ne.s32.totalorder %s78, %s80
      %p84 = scmp.eq.s32.totalorder %s9, 0
      %p85 = por %p83, %p84
      %p86 = scmp.ne.s32.totalorder %s78, %s80
      %p87 = scmp.eq.s32.totalorder %s14, 3
      %p88 = por %p86, %p87
      %p89 = scmp.ne.s32.totalorder %s80, %s81
      %p90 = scmp.eq.s32.totalorder %s14, 0
      %p91 = por %p89, %p90
      %p92 = scmp.ne.s32.totalorder %s80, %s81
      %p93 = scmp.eq.s32.totalorder %s15, 3
      %p94 = por %p92, %p93
      %p96 = scmp.ne.s32.totalorder %s81, %s95
      %p97 = scmp.eq.s32.totalorder %s15, 0
      %p98 = por %p96, %p97
      %s99 = ssub.s32 %s16, %s28
      %s100 = ssub.s32 %s17, %s24
      %s101 = sor.u32 %s99, %s100
      %p102 = scmp.eq.s32.totalorder %s101, 0
      %s104 = sadd.s32 %s103, 1
      %s105 = scalar_select %p102, %s103, %s104
      %p108 = pneg %p102
      %p109 = scmp.eq.s32.totalorder %s9, 3
      %p110 = por %p108, %p109
      %p111 = scmp.ne.s32.totalorder %s103, %s106
      %p112 = scmp.eq.s32.totalorder %s9, 0
      %p113 = por %p111, %p112
      %p114 = scmp.ne.s32.totalorder %s103, %s106
      %p115 = scmp.eq.s32.totalorder %s14, 3
      %p116 = por %p114, %p115
      %p117 = scmp.ne.s32.totalorder %s106, %s107
      %p118 = scmp.eq.s32.totalorder %s14, 0
      %p119 = por %p117, %p118
      %p120 = scmp.ne.s32.totalorder %s106, %s107
      %p121 = scmp.eq.s32.totalorder %s15, 3
      %p122 = por %p120, %p121
      %p124 = scmp.ne.s32.totalorder %s107, %s123
      %p125 = scmp.eq.s32.totalorder %s15, 0
      %p126 = por %p124, %p125
      %p127 = scmp.le.s32.totalorder 1, %s9
      %p128 = scmp.lt.s32.totalorder %s9, 5
      %p129 = pnand %p127, %p128
      %p130 = pneg %p129
      // Predicated region
      $region9: #{encoder_forward.1} parent=5 // pred_check
        _
      $region10: #{encoder_forward.1} parent=5 // pred_check_branch
        %132 = sbr.rel (%p129) target = $region12
      $region11: #{encoder_forward.1} parent=5 // pred_region
        %s133 = ssub.s32 %s9, 1
        // Predicated region
        $region13: #{encoder_forward.1} parent=11 // pred_check
          %p134 = pneg %p70
        $region14: #{encoder_forward.1} parent=11 // pred_check_branch
          %136 = sbr.rel (%p134) target = $region16
        $region15: #{encoder_forward.1} parent=11 // pred_region
          _
        $region16: #{encoder_forward.1} parent=11 // pred_fallthru
          _
        // Predicated region
        $region17: #{encoder_forward.1} parent=11 // pred_check
          %p137 = pneg %p91
        $region18: #{encoder_forward.1} parent=11 // pred_check_branch
          %139 = sbr.rel (%p137) target = $region20
        $region19: #{encoder_forward.1} parent=11 // pred_region
          _
        $region20: #{encoder_forward.1} parent=11 // pred_fallthru
          _
      $region12: #{encoder_forward.1} parent=5 // pred_fallthru
        _
      %p140 = scmp.lt.s32.totalorder %s9, 4
      // Predicated region
      $region21: #{encoder_forward.1} parent=5 // pred_check
        %p141 = pneg %p140
      $region22: #{encoder_forward.1} parent=5 // pred_check_branch
        %143 = sbr.rel (%p141) target = $region24
      $region23: #{encoder_forward.1} parent=5 // pred_region
        // Predicated region
        $region25: #{encoder_forward.1} parent=23 // pred_check
          %p144 = pneg %p43
        $region26: #{encoder_forward.1} parent=23 // pred_check_branch
          %146 = sbr.rel (%p144) target = $region28
        $region27: #{encoder_forward.1} parent=23 // pred_region
          %s147 = sand.u32 %s33, 1
          %s148 = sand.u32 %s33, 1
          %s149 = smul.addr %s148, 32
          %s150 = scalar_lea.vmem [#allocation2], %s149
          %s151 = smul.u32 4, %s16
          %s152 = smul.addr %s151, 4
          %s153 = sadd.s32 %s17, %s152
          %s154 = smul.addr %s153, 8
          %s155 = scalar_lea.vmem %s0, %s154
          // Predicated region
          $region29: #{encoder_forward.1} parent=27 // pred_check
            _
          $region30: #{encoder_forward.1} parent=27 // pred_check_branch
            %157 = sbr.rel (0) target = $region32
          $region31: #{encoder_forward.1} parent=27 // pred_region
            // Predicated region
            $region33: #{encoder_forward.1} parent=31 // pred_check
              _
            $region34: #{encoder_forward.1} parent=31 // pred_check_branch
              %159 = sbr.rel (0) target = $region36
            $region35: #{encoder_forward.1} parent=31 // pred_region
              // Predicated region
              $region48: #{encoder_forward.1} parent=35 // pred_check
                _
              $region49: #{encoder_forward.1} parent=35 // pred_check_branch
                %181 = sbr.rel (0) target = $region51
              $region50: #{encoder_forward.1} parent=35 // pred_region
                loop: start=0, step=1, limit=1
                $region52: #{encoder_forward.1} parent=50 // loop_pre_header
                  _
                $region53: #{encoder_forward.1} parent=50 // loop_header
                  %s183 = sphi 0, %s187
                  %p184 = scmp.ge.s32.totalorder %s183, 1
                  %s188 = sphi %s155, %s155
                  %s189 = sphi %s150, %s150
                $region54: #{encoder_forward.1} parent=50 // loop_header_branch
                  %186 = sbr.rel (%p184) target = $region58
                $region55: #{encoder_forward.1} parent=50 // loop_body
                  %v190 = vld [vmem:[%s188] sm:$0xff]
                  %191 = vst [vmem:[%s189] sm:$0xff] %v190
                  %v192 = vld [vmem:[%s188 + $0x20] sm:$0xff]
                  %193 = vst [vmem:[%s189 + $0x8] sm:$0xff] %v192
                  %v194 = vld [vmem:[%s188 + $0x40] sm:$0xff]
                  %195 = vst [vmem:[%s189 + $0x10] sm:$0xff] %v194
                  %v196 = vld [vmem:[%s188 + $0x60] sm:$0xff]
                  %197 = vst [vmem:[%s189 + $0x18] sm:$0xff] %v196
                $region56: #{encoder_forward.1} parent=50 // loop_footer
                  %s187 = sadd.s32 1, %s183
                $region57: #{encoder_forward.1} parent=50 // loop_footer_branch
                  %182 = sbr.rel target = $region53
                $region58: #{encoder_forward.1} parent=50 // loop_exit
                  _
              $region51: #{encoder_forward.1} parent=35 // pred_fallthru
                _
              // Predicated region
              $region59: #{encoder_forward.1} parent=35 // pred_check
                _
              $region60: #{encoder_forward.1} parent=35 // pred_check_branch
                %199 = sbr.rel target = $region62
              $region61: #{encoder_forward.1} parent=35 // pred_region
                _
              $region62: #{encoder_forward.1} parent=35 // pred_fallthru
                _
            $region36: #{encoder_forward.1} parent=31 // pred_fallthru
              _
            // Predicated region
            $region37: #{encoder_forward.1} parent=31 // pred_check
              _
            $region38: #{encoder_forward.1} parent=31 // pred_check_branch
              %161 = sbr.rel target = $region40
            $region39: #{encoder_forward.1} parent=31 // pred_region
              %s163 = ssub.s32 256, 1
              loop: start=0, step=1, limit=1
              $region41: #{encoder_forward.1} parent=39 // loop_pre_header
                _
              $region42: #{encoder_forward.1} parent=39 // loop_header
                %s165 = sphi 0, %s169
                %p166 = scmp.ge.s32.totalorder %s165, 1
                %s170 = sphi %s155, %s155
                %s171 = sphi %s150, %s150
              $region43: #{encoder_forward.1} parent=39 // loop_header_branch
                %168 = sbr.rel (%p166) target = $region47
              $region44: #{encoder_forward.1} parent=39 // loop_body
                %v172 = vld [vmem:[%s170] sm:%s163]
                %173 = vst [vmem:[%s171] sm:%s163] %v172
                %v174 = vld [vmem:[%s170 + $0x20] sm:%s163]
                %175 = vst [vmem:[%s171 + $0x8] sm:%s163] %v174
                %v176 = vld [vmem:[%s170 + $0x40] sm:%s163]
                %177 = vst [vmem:[%s171 + $0x10] sm:%s163] %v176
                %v178 = vld [vmem:[%s170 + $0x60] sm:%s163]
                %179 = vst [vmem:[%s171 + $0x18] sm:%s163] %v178
              $region45: #{encoder_forward.1} parent=39 // loop_footer
                %s169 = sadd.s32 1, %s165
              $region46: #{encoder_forward.1} parent=39 // loop_footer_branch
                %164 = sbr.rel target = $region42
              $region47: #{encoder_forward.1} parent=39 // loop_exit
                _
            $region40: #{encoder_forward.1} parent=31 // pred_fallthru
              _
          $region32: #{encoder_forward.1} parent=27 // pred_fallthru
            _
          %200 = vnop
        $region28: #{encoder_forward.1} parent=23 // pred_fallthru
          _
      $region24: #{encoder_forward.1} parent=5 // pred_fallthru
        _
      %p201 = scmp.le.s32.totalorder 1, %s9
      %p202 = scmp.lt.s32.totalorder %s9, 5
      %p203 = pnand %p201, %p202
      %p204 = pneg %p203
      // Predicated region
      $region63: #{encoder_forward.1} parent=5 // pred_check
        _
      $region64: #{encoder_forward.1} parent=5 // pred_check_branch
        %206 = sbr.rel (%p203) target = $region66
      $region65: #{encoder_forward.1} parent=5 // pred_region
        %s207 = ssub.s32 %s9, 1
        %s208 = sand.u32 %s36, 1
        %s209 = sand.u32 %s36, 1
        %s210 = smul.addr %s209, 32
        %s211 = scalar_lea.vmem [#allocation2], %s210
        // Predicated region
        $region67: #{encoder_forward.1} parent=65 // pred_check
          %p212 = pneg %p49
        $region68: #{encoder_forward.1} parent=65 // pred_check_branch
          %214 = sbr.rel (%p212) target = $region70
        $region69: #{encoder_forward.1} parent=65 // pred_region
          _
        $region70: #{encoder_forward.1} parent=65 // pred_fallthru
          _
        %s215 = sand.u32 %s36, 1
        %s216 = sand.u32 %s36, 1
        %s217 = smul.addr %s216, 32
        %s218 = scalar_lea.vmem [#allocation2], %s217
        %p219 = pneg %p49
        %p220 = pneg %p46
        %p221 = pneg %p70
        %p222 = pneg %p67
        %p223 = pneg %p91
        %p224 = pneg %p88
        %p225 = pneg %p119
        %p226 = pneg %p116
        %s227 = sand.u32 %s106, 1
        %s228 = sand.u32 %s106, 1
        %s229 = smul.addr %s228, 32
        %s230 = scalar_lea.vmem [#allocation3], %s229
        %s231 = smul.u32 4, %s18
        %s232 = smul.u32 4, %s18
        %v233 = vld [vmem:[%s1] sm:$0x7f]
        %v234 = vld [vmem:[%s2] sm:$0x7f]
        %v235 = vld [vmem:[%s211] sm:$0x7f]
        %237 = vset.pattern.permute.xlu0 0
        %238 = vperm.xlu0 %237, %v234
        %v239 = vpop.permute.xlu0 %238
        %vm241 = vcmask 56320
        %v243 = vsel %vm241, %v233, 0
        %vm245 = vcmask 1046528
        %v247 = vsel %vm245, %v235, 0
        %249 = vmatpush.msra.mxu0 0.0
        %250 = vmatpush.msra.mxu0 0.0
        %251 = vmatpush.msra.mxu0 0.0
        %252 = vmatpush.msra.mxu0 0.0
        %253 = vmatpush.msra.mxu0 0.0
        %254 = vmatpush.msra.mxu0 0.0
        %255 = vmatpush.msra.mxu0 0.0
        %256 = vmatpush.msra.mxu0 0.0
        %257 = vmatpush.msra.mxu0 0.0
        %258 = vmatpush.msra.mxu0 0.0
        %259 = vmatpush.msra.mxu0 0.0
        %260 = vmatpush.msra.mxu0 0.0
        %261 = vmatpush.msra.mxu0 0.0
        %262 = vmatpush.msra.mxu0 0.0
        %263 = vmatpush.msra.mxu0 0.0
        %264 = vmatpush.msra.mxu0 %v247
        %265 = vmatmul.f32.gmra.mxu0 %v243
        %v266 = vpop.f32.mrf.mxu0
        %v267 = vadd.f32 %v239, %v266
        %268 = vdwg.mxu0
        %269 = vst [vmem:[%s230] sm:$0x7f] %v267
        %s270 = scalar_lea.vmem %s211, 8 [#allocation2]
        %v271 = vld [vmem:[%s270] sm:$0x7f]
        %v273 = vsel %vm245, %v271, 0
        %275 = vmatpush.msra.mxu0 0.0
        %276 = vmatpush.msra.mxu0 0.0
        %277 = vmatpush.msra.mxu0 0.0
        %278 = vmatpush.msra.mxu0 0.0
        %279 = vmatpush.msra.mxu0 0.0
        %280 = vmatpush.msra.mxu0 0.0
        %281 = vmatpush.msra.mxu0 0.0
        %282 = vmatpush.msra.mxu0 0.0
        %283 = vmatpush.msra.mxu0 0.0
        %284 = vmatpush.msra.mxu0 0.0
        %285 = vmatpush.msra.mxu0 0.0
        %286 = vmatpush.msra.mxu0 0.0
        %287 = vmatpush.msra.mxu0 0.0
        %288 = vmatpush.msra.mxu0 0.0
        %289 = vmatpush.msra.mxu0 0.0
        %290 = vmatpush.msra.mxu0 %v273
        %291 = vmatmul.f32.gmra.mxu0 %v243
        %v292 = vpop.f32.mrf.mxu0
        %v293 = vadd.f32 %v239, %v292
        %294 = vdwg.mxu0
        %s295 = scalar_lea.vmem %s230, 8 [#allocation3]
        %296 = vst [vmem:[%s295] sm:$0x7f] %v293
        %s297 = scalar_lea.vmem %s211, 16 [#allocation2]
        %v298 = vld [vmem:[%s297] sm:$0x7f]
        %v300 = vsel %vm245, %v298, 0
        %302 = vmatpush.msra.mxu0 0.0
        %303 = vmatpush.msra.mxu0 0.0
        %304 = vmatpush.msra.mxu0 0.0
        %305 = vmatpush.msra.mxu0 0.0
        %306 = vmatpush.msra.mxu0 0.0
        %307 = vmatpush.msra.mxu0 0.0
        %308 = vmatpush.msra.mxu0 0.0
        %309 = vmatpush.msra.mxu0 0.0
        %310 = vmatpush.msra.mxu0 0.0
        %311 = vmatpush.msra.mxu0 0.0
        %312 = vmatpush.msra.mxu0 0.0
        %313 = vmatpush.msra.mxu0 0.0
        %314 = vmatpush.msra.mxu0 0.0
        %315 = vmatpush.msra.mxu0 0.0
        %316 = vmatpush.msra.mxu0 0.0
        %317 = vmatpush.msra.mxu0 %v300
        %318 = vmatmul.f32.gmra.mxu0 %v243
        %v319 = vpop.f32.mrf.mxu0
        %v320 = vadd.f32 %v239, %v319
        %321 = vdwg.mxu0
        %s322 = scalar_lea.vmem %s230, 16 [#allocation3]
        %323 = vst [vmem:[%s322] sm:$0x7f] %v320
        %s324 = scalar_lea.vmem %s211, 24 [#allocation2]
        %v325 = vld [vmem:[%s324] sm:$0x7f]
        %v327 = vsel %vm245, %v325, 0
        %329 = vmatpush.msra.mxu0 0.0
        %330 = vmatpush.msra.mxu0 0.0
        %331 = vmatpush.msra.mxu0 0.0
        %332 = vmatpush.msra.mxu0 0.0
        %333 = vmatpush.msra.mxu0 0.0
        %334 = vmatpush.msra.mxu0 0.0
        %335 = vmatpush.msra.mxu0 0.0
        %336 = vmatpush.msra.mxu0 0.0
        %337 = vmatpush.msra.mxu0 0.0
        %338 = vmatpush.msra.mxu0 0.0
        %339 = vmatpush.msra.mxu0 0.0
        %340 = vmatpush.msra.mxu0 0.0
        %341 = vmatpush.msra.mxu0 0.0
        %342 = vmatpush.msra.mxu0 0.0
        %343 = vmatpush.msra.mxu0 0.0
        %344 = vmatpush.msra.mxu0 %v327
        %345 = vmatmul.f32.gmra.mxu0 %v243
        %v346 = vpop.f32.mrf.mxu0
        %v347 = vadd.f32 %v239, %v346
        %348 = vdwg.mxu0
        %s349 = scalar_lea.vmem %s230, 24 [#allocation3]
        %350 = vst [vmem:[%s349] sm:$0x7f] %v347
        %s351 = sand.u32 %s106, 1
        %s352 = sand.u32 %s106, 1
        %s353 = smul.addr %s352, 32
        %s354 = scalar_lea.vmem [#allocation3], %s353
        // Predicated region
        $region71: #{encoder_forward.1} parent=65 // pred_check
          %p355 = pneg %p116
        $region72: #{encoder_forward.1} parent=65 // pred_check_branch
          %357 = sbr.rel (%p355) target = $region74
        $region73: #{encoder_forward.1} parent=65 // pred_region
          %s358 = smul.u32 4, %s18
          %s359 = smul.addr %s358, 4
          %s360 = sadd.s32 %s19, %s359
          %s361 = smul.addr %s360, 8
          %s362 = scalar_lea.vmem %s3, %s361
          // Predicated region
          $region75: #{encoder_forward.1} parent=73 // pred_check
            _
          $region76: #{encoder_forward.1} parent=73 // pred_check_branch
            %364 = sbr.rel (0) target = $region78
          $region77: #{encoder_forward.1} parent=73 // pred_region
            // Predicated region
            $region79: #{encoder_forward.1} parent=77 // pred_check
              _
            $region80: #{encoder_forward.1} parent=77 // pred_check_branch
              %366 = sbr.rel (0) target = $region82
            $region81: #{encoder_forward.1} parent=77 // pred_region
              // Predicated region
              $region94: #{encoder_forward.1} parent=81 // pred_check
                _
              $region95: #{encoder_forward.1} parent=81 // pred_check_branch
                %388 = sbr.rel (0) target = $region97
              $region96: #{encoder_forward.1} parent=81 // pred_region
                loop: start=0, step=1, limit=1
                $region98: #{encoder_forward.1} parent=96 // loop_pre_header
                  _
                $region99: #{encoder_forward.1} parent=96 // loop_header
                  %s390 = sphi 0, %s394
                  %p391 = scmp.ge.s32.totalorder %s390, 1
                  %s395 = sphi %s354, %s354
                  %s396 = sphi %s362, %s362
                $region100: #{encoder_forward.1} parent=96 // loop_header_branch
                  %393 = sbr.rel (%p391) target = $region104
                $region101: #{encoder_forward.1} parent=96 // loop_body
                  %v397 = vld [vmem:[%s395] sm:$0xff]
                  %398 = vst [vmem:[%s396] sm:$0xff] %v397
                  %v399 = vld [vmem:[%s395 + $0x8] sm:$0xff]
                  %400 = vst [vmem:[%s396 + $0x20] sm:$0xff] %v399
                  %v401 = vld [vmem:[%s395 + $0x10] sm:$0xff]
                  %402 = vst [vmem:[%s396 + $0x40] sm:$0xff] %v401
                  %v403 = vld [vmem:[%s395 + $0x18] sm:$0xff]
                  %404 = vst [vmem:[%s396 + $0x60] sm:$0xff] %v403
                $region102: #{encoder_forward.1} parent=96 // loop_footer
                  %s394 = sadd.s32 1, %s390
                $region103: #{encoder_forward.1} parent=96 // loop_footer_branch
                  %389 = sbr.rel target = $region99
                $region104: #{encoder_forward.1} parent=96 // loop_exit
                  _
              $region97: #{encoder_forward.1} parent=81 // pred_fallthru
                _
              // Predicated region
              $region105: #{encoder_forward.1} parent=81 // pred_check
                _
              $region106: #{encoder_forward.1} parent=81 // pred_check_branch
                %406 = sbr.rel target = $region108
              $region107: #{encoder_forward.1} parent=81 // pred_region
                _
              $region108: #{encoder_forward.1} parent=81 // pred_fallthru
                _
            $region82: #{encoder_forward.1} parent=77 // pred_fallthru
              _
            // Predicated region
            $region83: #{encoder_forward.1} parent=77 // pred_check
              _
            $region84: #{encoder_forward.1} parent=77 // pred_check_branch
              %368 = sbr.rel target = $region86
            $region85: #{encoder_forward.1} parent=77 // pred_region
              %s370 = ssub.s32 256, 1
              loop: start=0, step=1, limit=1
              $region87: #{encoder_forward.1} parent=85 // loop_pre_header
                _
              $region88: #{encoder_forward.1} parent=85 // loop_header
                %s372 = sphi 0, %s376
                %p373 = scmp.ge.s32.totalorder %s372, 1
                %s377 = sphi %s354, %s354
                %s378 = sphi %s362, %s362
              $region89: #{encoder_forward.1} parent=85 // loop_header_branch
                %375 = sbr.rel (%p373) target = $region93
              $region90: #{encoder_forward.1} parent=85 // loop_body
                %v379 = vld [vmem:[%s377] sm:%s370]
                %380 = vst [vmem:[%s378] sm:%s370] %v379
                %v381 = vld [vmem:[%s377 + $0x8] sm:%s370]
                %382 = vst [vmem:[%s378 + $0x20] sm:%s370] %v381
                %v383 = vld [vmem:[%s377 + $0x10] sm:%s370]
                %384 = vst [vmem:[%s378 + $0x40] sm:%s370] %v383
                %v385 = vld [vmem:[%s377 + $0x18] sm:%s370]
                %386 = vst [vmem:[%s378 + $0x60] sm:%s370] %v385
              $region91: #{encoder_forward.1} parent=85 // loop_footer
                %s376 = sadd.s32 1, %s372
              $region92: #{encoder_forward.1} parent=85 // loop_footer_branch
                %371 = sbr.rel target = $region88
              $region93: #{encoder_forward.1} parent=85 // loop_exit
                _
            $region86: #{encoder_forward.1} parent=77 // pred_fallthru
              _
          $region78: #{encoder_forward.1} parent=73 // pred_fallthru
            _
          %407 = vnop
        $region74: #{encoder_forward.1} parent=65 // pred_fallthru
          _
      $region66: #{encoder_forward.1} parent=5 // pred_fallthru
        _
      %p408 = scmp.le.s32.totalorder 2, %s9
      // Predicated region
      $region109: #{encoder_forward.1} parent=5 // pred_check
        %p409 = pneg %p408
      $region110: #{encoder_forward.1} parent=5 // pred_check_branch
        %411 = sbr.rel (%p409) target = $region112
      $region111: #{encoder_forward.1} parent=5 // pred_region
        %s412 = ssub.s32 %s9, 2
        // Predicated region
        $region113: #{encoder_forward.1} parent=111 // pred_check
          %p413 = pneg %p122
        $region114: #{encoder_forward.1} parent=111 // pred_check_branch
          %415 = sbr.rel (%p413) target = $region116
        $region115: #{encoder_forward.1} parent=111 // pred_region
          %s416 = sand.u32 %s107, 1
          %s417 = sand.u32 %s107, 1
          %s418 = smul.addr %s417, 32
          %s419 = scalar_lea.vmem [#allocation3], %s418
        $region116: #{encoder_forward.1} parent=111 // pred_fallthru
          _
      $region112: #{encoder_forward.1} parent=5 // pred_fallthru
        _
    $region6: #{encoder_forward.1} parent=1 // loop_footer
      %s13 = sadd.s32 1, %s9
    $region7: #{encoder_forward.1} parent=1 // loop_footer_branch
      %8 = sbr.rel target = $region3
    $region8: #{encoder_forward.1} parent=1 // loop_exit
      _

</llo_original>
